<compile_context>
chip_gen: v7x
topology: tpu7x:2x2x1
jax: 0.10.0
libtpu: 0.0.40
codegen_flags: <defaults>
</compile_context>

<pallas_src>
import functools

import jax
import jax.numpy as jnp
from jax import lax
from jax.experimental import pallas as pl
from jax.experimental.pallas import tpu as pltpu


# ----------------------------------------------------------------------------- #
# Node-update kernel (one TrueCompGCNConv layer, tiled over nodes x edges)
# ----------------------------------------------------------------------------- #
def _compgcn_conv_kernel(tail_ref, x_ref, xsrc_ref, reledge_ref,
                         wcomb_ref, b_ref, h_ref, acc_ref, *, residual):
    """
    tail_ref    [1, te]        int32 tail node id per edge (padded edges use -1)
    x_ref       [tn, Din]      node features for this node tile
    xsrc_ref    [te, Din]      source-node features gathered per edge
    reledge_ref [te, Din]      relation embeddings gathered per edge
    wcomb_ref   [2*Din, Dout]  bf16 stacked [W_msg; W_self]
    b_ref       [1, Dout]      bias
    h_ref       [tn, Dout]     output node features
    acc_ref     [tn, Din]      f32 accumulator scratch (aggregated messages)
    """
    i = pl.program_id(0)          # node-tile index
    k = pl.program_id(1)          # edge-tile index (reduction axis, last in grid)
    tn = x_ref.shape[0]
    te = xsrc_ref.shape[0]

    @pl.when(k == 0)
    def _():
        acc_ref[...] = jnp.zeros_like(acc_ref)

    # DistMult message in f32 on the VPU (v5e VPU has no bf16), cast for the MXU.
    msg = (xsrc_ref[...] * reledge_ref[...]).astype(jnp.bfloat16)          # [te, Din]

    # Incidence tile built on the fly: A[v, e] = 1 iff tail(e) == global row v.
    row_ids = i * tn + lax.broadcasted_iota(jnp.int32, (tn, te), 0)        # [tn, te]
    a_tile = (row_ids == tail_ref[...]).astype(jnp.bfloat16)               # [tn, te]

    # scatter-add as an MXU matmul with exact f32 accumulation
    acc_ref[...] += jnp.dot(a_tile, msg, preferred_element_type=jnp.float32)

    @pl.when(k == pl.num_programs(1) - 1)
    def _():
        # Fused combine: [agg, x] @ [W_msg; W_self] + b  (single MXU pass, K = 2*Din)
        comb = jnp.concatenate([acc_ref[...], x_ref[...]],
                               axis=1).astype(jnp.bfloat16)                # [tn, 2*Din]
        upd = jnp.dot(comb, wcomb_ref[...],
                      preferred_element_type=jnp.float32) + b_ref[...]     # [tn, Dout]
        h = jnp.maximum(upd, 0.0)
        if residual:                      # short_cut fused (Din == Dout, x resident)
            h = h + x_ref[...]
        h_ref[...] = h.astype(h_ref.dtype)


def compgcn_conv(x, x_src, rel_edge, edge_tail2d, wcomb_bf16, b, *,
                 residual, tile_n=128, tile_e=256):
    N, Din = x.shape
    E = x_src.shape[0]
    Dout = wcomb_bf16.shape[1]
    tn = N if N < tile_n else tile_n
    te = E if E < tile_e else tile_e
    assert N % tn == 0 and E % te == 0, "caller must pad N/E to tile multiples"
    grid = (N // tn, E // te)

    kernel = functools.partial(_compgcn_conv_kernel, residual=residual)

    flops = 2 * N * E * Din + 2 * N * (2 * Din) * Dout + E * Din
    bytes_accessed = 4 * (N * Din + 2 * E * Din + E + N * Dout) + 2 * (2 * Din * Dout)

    return pl.pallas_call(
        kernel,
        out_shape=jax.ShapeDtypeStruct((N, Dout), jnp.float32),
        grid_spec=pltpu.PrefetchScalarGridSpec(
            num_scalar_prefetch=0,
            grid=grid,
            in_specs=[
                pl.BlockSpec((1, te), lambda i, k: (0, k)),          # edge tails
                pl.BlockSpec((tn, Din), lambda i, k: (i, 0)),        # x (node tile)
                pl.BlockSpec((te, Din), lambda i, k: (k, 0)),        # x[src]
                pl.BlockSpec((te, Din), lambda i, k: (k, 0)),        # rel[type]
                pl.BlockSpec((2 * Din, Dout), lambda i, k: (0, 0)),  # [W_msg; W_self]
                pl.BlockSpec((1, Dout), lambda i, k: (0, 0)),        # bias
            ],
            out_specs=pl.BlockSpec((tn, Dout), lambda i, k: (i, 0)),
            scratch_shapes=[pltpu.VMEM((tn, Din), jnp.float32)],
        ),
        compiler_params=pltpu.CompilerParams(
            dimension_semantics=("parallel", "arbitrary"),
            vmem_limit_bytes=32 * 1024 * 1024,
        ),
        cost_estimate=pl.CostEstimate(
            flops=flops, transcendentals=0, bytes_accessed=bytes_accessed),
    )(edge_tail2d, x, x_src, rel_edge, wcomb_bf16, b)


# ----------------------------------------------------------------------------- #
# Relation-update kernel (tiny, separate call so it is not re-run per grid step)
# ----------------------------------------------------------------------------- #
def _rel_update_kernel(rel_ref, wrel_ref, brel_ref, out_ref):
    out_ref[...] = (jnp.dot(rel_ref[...].astype(jnp.bfloat16), wrel_ref[...],
                            preferred_element_type=jnp.float32)
                    + brel_ref[...])


def rel_update(rel, wrel_bf16, brel):
    R = rel.shape[0]
    Dout = wrel_bf16.shape[1]
    vmem = pl.BlockSpec(memory_space=pltpu.MemorySpace.VMEM)
    return pl.pallas_call(
        _rel_update_kernel,
        out_shape=jax.ShapeDtypeStruct((R, Dout), jnp.float32),
        in_specs=[vmem, vmem, vmem],
        out_specs=vmem,
    )(rel, wrel_bf16, brel)


# ----------------------------------------------------------------------------- #
# CompGCN forward wrapper (concat_hidden=False path)
# ----------------------------------------------------------------------------- #
def _round_up(v, m):
    return ((v + m - 1) // m) * m


def compgcn_forward(edge_index, edge_type, node_input, relation_embs, params,
                    short_cut=True, tile_n=128, tile_e=256):
    """edge_index: [2, E] int32 (row 0 = source, row 1 = tail); edge_type: [E] int32."""
    N = node_input.shape[0]
    E = edge_index.shape[1]

    N_pad = N if N < tile_n else _round_up(N, tile_n)
    E_pad = E if E < tile_e else _round_up(E, tile_e)

    src = edge_index[0].astype(jnp.int32)
    tail = edge_index[1].astype(jnp.int32)
    typ = edge_type.astype(jnp.int32)
    if E_pad > E:
        pad = E_pad - E
        src = jnp.concatenate([src, jnp.zeros((pad,), jnp.int32)])
        typ = jnp.concatenate([typ, jnp.zeros((pad,), jnp.int32)])
        tail = jnp.concatenate([tail, jnp.full((pad,), -1, jnp.int32)])  # never matches
    tail2d = tail.reshape(1, E_pad)

    layer_input = node_input
    if N_pad > N:
        layer_input = jnp.concatenate(
            [layer_input,
             jnp.zeros((N_pad - N, node_input.shape[1]), node_input.dtype)], axis=0)

    rel = relation_embs
    for (wmsg, wself, b, wrel, brel) in params:
        Din = layer_input.shape[1]
        Dout = wmsg.shape[1]
        wcomb = jnp.concatenate([wmsg, wself], axis=0).astype(jnp.bfloat16)
        # TODO(synk): move per-edge row gathers into the kernel (manual DMA with
        # scalar-prefetched indices); kept as wrapper glue here.
        x_src = jnp.take(layer_input, src, axis=0)        # [E_pad, Din]
        rel_edge = jnp.take(rel, typ, axis=0)             # [E_pad, Din]
        hidden = compgcn_conv(layer_input, x_src, rel_edge, tail2d, wcomb, b,
                              residual=(short_cut and Din == Dout),
                              tile_n=tile_n, tile_e=tile_e)
        rel = rel_update(rel, wrel.astype(jnp.bfloat16), brel)
        layer_input = hidden

    # TODO(synk): concat_hidden=True (MLP over concatenated hiddens), use_attention,
    # use_boundary and layer_norm options are not exercised (module defaults off).
    node_feature = layer_input[:N]
    return node_feature, rel


# ----------------------------------------------------------------------------- #
# Pure-JAX reference (f32) for a correctness check
# ----------------------------------------------------------------------------- #
def compgcn_reference(edge_index, edge_type, node_input, relation_embs, params,
                      short_cut=True):
    N = node_input.shape[0]
    layer_input = node_input
    rel = relation_embs
    for (wmsg, wself, b, wrel, brel) in params:
        x_src = layer_input[edge_index[0]]
        rel_edge = rel[edge_type]
        msg = x_src * rel_edge
        agg = jnp.zeros((N, layer_input.shape[1]), jnp.float32).at[edge_index[1]].add(msg)
        hidden = jnp.maximum(agg @ wmsg + layer_input @ wself + b, 0.0)
        if short_cut and hidden.shape == layer_input.shape:
            hidden = hidden + layer_input
        rel = rel @ wrel + brel
        layer_input = hidden
    return layer_input, rel


def init_params(key, dims):
    params = []
    for i in range(len(dims) - 1):
        din, dout = dims[i], dims[i + 1]
        key, k0, k1, k2 = jax.random.split(key, 4)
        scale = 1.0 / jnp.sqrt(jnp.float32(din))
        wmsg = jax.random.normal(k0, (din, dout), jnp.float32) * scale
        wself = jax.random.normal(k1, (din, dout), jnp.float32) * scale
        b = jnp.zeros((1, dout), jnp.float32)
        wrel = jax.random.normal(k2, (din, dout), jnp.float32) * scale
        brel = jnp.zeros((1, dout), jnp.float32)
        params.append((wmsg, wself, b, wrel, brel))
    return params


if __name__ == "__main__":
    key = jax.random.PRNGKey(0)
    N, E, R = 256, 512, 8               # nodes, edges, relations
    hidden_dims = [128, 128, 128]       # -> 2 TrueCompGCNConv layers, lane-dense dims

    k_x, k_r, k_e, k_t, k_p = jax.random.split(key, 5)
    node_input = jax.random.normal(k_x, (N, hidden_dims[0]), jnp.float32)
    relation_embs = jax.random.normal(k_r, (R, hidden_dims[0]), jnp.float32)
    edge_index = jax.random.randint(k_e, (2, E), 0, N, dtype=jnp.int32)
    edge_type = jax.random.randint(k_t, (E,), 0, R, dtype=jnp.int32)

    params = init_params(k_p, hidden_dims)

    node_feature, rel_out = compgcn_forward(edge_index, edge_type, node_input,
                                            relation_embs, params, short_cut=True)
    jax.block_until_ready((node_feature, rel_out))
    assert node_feature.shape == (N, hidden_dims[-1])
    assert rel_out.shape == (R, hidden_dims[-1])

    # Correctness vs f32 reference (kernel uses bf16 MXU operands -> loose tolerance).
    ref_nodes, ref_rel = compgcn_reference(edge_index, edge_type, node_input,
                                           relation_embs, params, short_cut=True)
    node_err = jnp.max(jnp.abs(node_feature - ref_nodes)) / (
        jnp.max(jnp.abs(ref_nodes)) + 1e-6)
    rel_err = jnp.max(jnp.abs(rel_out - ref_rel)) / (jnp.max(jnp.abs(ref_rel)) + 1e-6)
    assert float(node_err) < 5e-2, f"node rel-err too high: {float(node_err)}"
    assert float(rel_err) < 5e-2, f"relation rel-err too high: {float(rel_err)}"

    print("KERNEL_OK")
</pallas_src>

<mosaic_0001>
module attributes {stable_mosaic.version = 11 : i64} {
  func.func @_compgcn_conv_kernel(%arg0: i32, %arg1: i32, %arg2: memref<1x256xi32, #tpu.memory_space<vmem>>, %arg3: memref<128x128xf32, #tpu.memory_space<vmem>>, %arg4: memref<256x128xf32, #tpu.memory_space<vmem>>, %arg5: memref<256x128xf32, #tpu.memory_space<vmem>>, %arg6: memref<256x128xbf16, #tpu.memory_space<vmem>>, %arg7: memref<1x128xf32, #tpu.memory_space<vmem>>, %arg8: memref<128x128xf32, #tpu.memory_space<vmem>>, %arg9: memref<128x128xf32, #tpu.memory_space<vmem>>) attributes {dimension_semantics = [#tpu.dimension_semantics<parallel>, #tpu.dimension_semantics<arbitrary>], iteration_bounds = array<i64: 2, 2>, scalar_prefetch = 0 : i64, scratch_operands = 1 : i64, tpu.core_type = #tpu.core_type<tc>, window_params = [{transform_indices = @transform_0, window_bounds = array<i64: 1, 256>}, {transform_indices = @transform_1, window_bounds = array<i64: 128, 128>}, {transform_indices = @transform_2, window_bounds = array<i64: 256, 128>}, {transform_indices = @transform_3, window_bounds = array<i64: 256, 128>}, {pipeline_mode = #tpu.pipeline_mode<synchronous>, transform_indices = @transform_4, window_bounds = array<i64: 256, 128>}, {pipeline_mode = #tpu.pipeline_mode<synchronous>, transform_indices = @transform_5, window_bounds = array<i64: 1, 128>}, {transform_indices = @transform_6, window_bounds = array<i64: 128, 128>}]} {
    %c0_i32 = arith.constant 0 : i32
    %0 = arith.cmpi eq, %arg1, %c0_i32 : i32
    %1 = arith.extui %0 : i1 to i32
    %c0_i32_0 = arith.constant 0 : i32
    %2 = arith.cmpi ne, %1, %c0_i32_0 : i32
    scf.if %2 {
      %cst_11 = arith.constant 0.000000e+00 : f32
      %24 = vector.broadcast %cst_11 : f32 to vector<128x128xf32>
      %c0_12 = arith.constant 0 : index
      %c0_13 = arith.constant 0 : index
      %25 = vector.load %arg9[%c0_12, %c0_13] : memref<128x128xf32, #tpu.memory_space<vmem>>, vector<128x128xf32>
      tpu.vector_store %arg9[%c0_12, %c0_13], %24 {strides = array<i32>} : memref<128x128xf32, #tpu.memory_space<vmem>>, vector<128x128xf32>,
    } else {
    }
    %c0 = arith.constant 0 : index
    %c0_1 = arith.constant 0 : index
    %3 = vector.load %arg4[%c0, %c0_1] : memref<256x128xf32, #tpu.memory_space<vmem>>, vector<256x128xf32>
    %c0_2 = arith.constant 0 : index
    %c0_3 = arith.constant 0 : index
    %4 = vector.load %arg5[%c0_2, %c0_3] : memref<256x128xf32, #tpu.memory_space<vmem>>, vector<256x128xf32>
    %5 = arith.mulf %3, %4 : vector<256x128xf32>
    %6 = arith.truncf %5 : vector<256x128xf32> to vector<256x128xbf16>
    %c128_i32 = arith.constant 128 : i32
    %7 = arith.muli %arg0, %c128_i32 : i32
    %8 = tpu.iota {dimensions = array<i32: 0>} : vector<128x256xi32>
    %9 = vector.broadcast %7 : i32 to vector<128x256xi32>
    %10 = arith.addi %9, %8 : vector<128x256xi32>
    %c0_4 = arith.constant 0 : index
    %c0_5 = arith.constant 0 : index
    %11 = vector.load %arg2[%c0_4, %c0_5] : memref<1x256xi32, #tpu.memory_space<vmem>>, vector<1x256xi32>
    %12 = vector.broadcast %11 : vector<1x256xi32> to vector<128x256xi32>
    %13 = arith.cmpi eq, %10, %12 : vector<128x256xi32>
    %14 = arith.extui %13 : vector<128x256xi1> to vector<128x256xi32>
    %15 = arith.sitofp %14 : vector<128x256xi32> to vector<128x256xf32>
    %16 = arith.truncf %15 : vector<128x256xf32> to vector<128x256xbf16>
    %c0_6 = arith.constant 0 : index
    %c0_7 = arith.constant 0 : index
    %17 = vector.load %arg9[%c0_6, %c0_7] : memref<128x128xf32, #tpu.memory_space<vmem>>, vector<128x128xf32>
    %cst = arith.constant dense<0.000000e+00> : vector<128x128xf32>
    %18 = tpu.matmul %16, %6, %cst {dimension_numbers = #tpu.dot_dimension_numbers<[1], [0], [0], [1], [0, 0, 1, 1], [], []>} : vector<128x256xbf16>, vector<256x128xbf16>, vector<128x128xf32> -> vector<128x128xf32>
    %19 = arith.addf %17, %18 : vector<128x128xf32>
    %c0_8 = arith.constant 0 : index
    %c0_9 = arith.constant 0 : index
    %20 = vector.load %arg9[%c0_8, %c0_9] : memref<128x128xf32, #tpu.memory_space<vmem>>, vector<128x128xf32>
    tpu.vector_store %arg9[%c0_8, %c0_9], %19 {strides = array<i32>} : memref<128x128xf32, #tpu.memory_space<vmem>>, vector<128x128xf32>,
    %c1_i32 = arith.constant 1 : i32
    %21 = arith.cmpi eq, %arg1, %c1_i32 : i32
    %22 = arith.extui %21 : i1 to i32
    %c0_i32_10 = arith.constant 0 : i32
    %23 = arith.cmpi ne, %22, %c0_i32_10 : i32
    scf.if %23 {
      %c0_11 = arith.constant 0 : index
      %c0_12 = arith.constant 0 : index
      %24 = vector.load %arg9[%c0_11, %c0_12] : memref<128x128xf32, #tpu.memory_space<vmem>>, vector<128x128xf32>
      %c0_13 = arith.constant 0 : index
      %c0_14 = arith.constant 0 : index
      %25 = vector.load %arg3[%c0_13, %c0_14] : memref<128x128xf32, #tpu.memory_space<vmem>>, vector<128x128xf32>
      %26 = tpu.concatenate %24, %25 in 1 : vector<128x128xf32>, vector<128x128xf32> -> vector<128x256xf32>
      %27 = arith.truncf %26 : vector<128x256xf32> to vector<128x256xbf16>
      %c0_15 = arith.constant 0 : index
      %c0_16 = arith.constant 0 : index
      %28 = vector.load %arg6[%c0_15, %c0_16] : memref<256x128xbf16, #tpu.memory_space<vmem>>, vector<256x128xbf16>
      %cst_17 = arith.constant dense<0.000000e+00> : vector<128x128xf32>
      %29 = tpu.matmul %27, %28, %cst_17 {dimension_numbers = #tpu.dot_dimension_numbers<[1], [0], [0], [1], [0, 0, 1, 1], [], []>} : vector<128x256xbf16>, vector<256x128xbf16>, vector<128x128xf32> -> vector<128x128xf32>
      %c0_18 = arith.constant 0 : index
      %c0_19 = arith.constant 0 : index
      %30 = vector.load %arg7[%c0_18, %c0_19] : memref<1x128xf32, #tpu.memory_space<vmem>>, vector<1x128xf32>
      %31 = vector.broadcast %30 : vector<1x128xf32> to vector<128x128xf32>
      %32 = arith.addf %29, %31 : vector<128x128xf32>
      %cst_20 = arith.constant 0.000000e+00 : f32
      %33 = vector.broadcast %cst_20 : f32 to vector<128x128xf32>
      %34 = arith.maximumf %32, %33 : vector<128x128xf32>
      %c0_21 = arith.constant 0 : index
      %c0_22 = arith.constant 0 : index
      %35 = vector.load %arg3[%c0_21, %c0_22] : memref<128x128xf32, #tpu.memory_space<vmem>>, vector<128x128xf32>
      %36 = arith.addf %34, %35 : vector<128x128xf32>
      %c0_23 = arith.constant 0 : index
      %c0_24 = arith.constant 0 : index
      %37 = vector.load %arg8[%c0_23, %c0_24] : memref<128x128xf32, #tpu.memory_space<vmem>>, vector<128x128xf32>
      tpu.vector_store %arg8[%c0_23, %c0_24], %36 {strides = array<i32>} : memref<128x128xf32, #tpu.memory_space<vmem>>, vector<128x128xf32>,
    } else {
    }
    return
  }
  func.func @transform_0(%arg0: i32, %arg1: i32) -> (i32, i32) {
    %c0_i32 = arith.constant 0 : i32
    %c0_i32_0 = arith.constant 0 : i32
    return %c0_i32, %arg1 : i32, i32
  }
  func.func @transform_1(%arg0: i32, %arg1: i32) -> (i32, i32) {
    %c0_i32 = arith.constant 0 : i32
    %c0_i32_0 = arith.constant 0 : i32
    return %arg0, %c0_i32 : i32, i32
  }
  func.func @transform_2(%arg0: i32, %arg1: i32) -> (i32, i32) {
    %c0_i32 = arith.constant 0 : i32
    %c0_i32_0 = arith.constant 0 : i32
    return %arg1, %c0_i32 : i32, i32
  }
  func.func @transform_3(%arg0: i32, %arg1: i32) -> (i32, i32) {
    %c0_i32 = arith.constant 0 : i32
    %c0_i32_0 = arith.constant 0 : i32
    return %arg1, %c0_i32 : i32, i32
  }
  func.func @transform_4(%arg0: i32, %arg1: i32) -> (i32, i32) {
    %c0_i32 = arith.constant 0 : i32
    %c0_i32_0 = arith.constant 0 : i32
    %c0_i32_1 = arith.constant 0 : i32
    return %c0_i32, %c0_i32_0 : i32, i32
  }
  func.func @transform_5(%arg0: i32, %arg1: i32) -> (i32, i32) {
    %c0_i32 = arith.constant 0 : i32
    %c0_i32_0 = arith.constant 0 : i32
    %c0_i32_1 = arith.constant 0 : i32
    return %c0_i32, %c0_i32_0 : i32, i32
  }
  func.func @transform_6(%arg0: i32, %arg1: i32) -> (i32, i32) {
    %c0_i32 = arith.constant 0 : i32
    %c0_i32_0 = arith.constant 0 : i32
    return %arg0, %c0_i32 : i32, i32
  }
}

</mosaic_0001>

<llo_original>
// kernel: tpu_custom_call.1
$region0: #{tpu_custom_call.1}
  #allocation0 [shape = 'u32[]', space=smem, size = 0x4, offset = 0x4, fixed_abs, tag = 'smem constant byte address 0x4 - core index']
  #allocation1 [shape = 'u32[144,128]{1,0:T(1,128)}', space=vmem, size = 0x12000, scoped, tag = 'internal scratch']
  #allocation2 [shape = 'f32[128,128]{1,0:T(8,128)}', space=vmem, size = 0x10000, scoped, tag = 'scratch operand']
  %s0 = inlined_call_operand.hbm [shape: s32[1,512], index: 0, kind: input, shape index: {}]
  %s1 = inlined_call_operand.hbm [shape: f32[256,128], index: 1, kind: input, shape index: {}]
  %s2 = inlined_call_operand.hbm [shape: f32[512,128], index: 2, kind: input, shape index: {}]
  %s3 = inlined_call_operand.hbm [shape: f32[512,128], index: 3, kind: input, shape index: {}]
  %s4 = inlined_call_operand.hbm [shape: bf16[256,128], index: 4, kind: input, shape index: {}]
  %s5 = inlined_call_operand.vmem [shape: f32[1,128], index: 5, kind: input, shape index: {}]
  %s6 = inlined_call_operand.hbm [shape: f32[256,128], index: 6, kind: output, shape index: {}]
  %s7 = sld [smem:[#allocation0]]
  $region85: #{tpu_custom_call.1} parent=0
    _
  %s9 = ssub.s32 1, %s7
  %s10 = scalar_select 0, %s9, %s7
  $region1: #{tpu_custom_call.1} parent=0
    #allocation3 [shape = 'u8[2048]{0}', space=vmem, size = 0x800, scoped, tag = 'input window, operand 0']
    #allocation4 [shape = 's32[2]{0}', space=sflag, size = 0x8, scoped, tag = 'scoped memory for tpu_custom_call.1']
    #allocation5 [shape = 's32[2]{0}', space=sflag, size = 0x8, scoped, tag = 'scoped memory for tpu_custom_call.1']
    #allocation6 [shape = 'u8[131072]{0}', space=vmem, size = 0x20000, scoped, tag = 'input window, operand 1']
    #allocation7 [shape = 's32[2]{0}', space=sflag, size = 0x8, scoped, tag = 'scoped memory for tpu_custom_call.1']
    #allocation8 [shape = 'u8[262144]{0}', space=vmem, size = 0x40000, scoped, tag = 'input window, operand 2']
    #allocation9 [shape = 'u8[262144]{0}', space=vmem, size = 0x40000, scoped, tag = 'input window, operand 3']
    #allocation10 [shape = 's32[2]{0}', space=sflag, size = 0x8, scoped, tag = 'scoped memory for tpu_custom_call.1']
    #allocation11 [shape = 'u8[65536]{0}', space=vmem, size = 0x10000, scoped, tag = 'input window, operand 4, single buffered']
    #allocation12 [shape = 'u8[131072]{0}', space=vmem, size = 0x20000, scoped, tag = 'output window, operand 0']
    %11 = vsyncpa [#allocation4], 0
    %s12 = scalar_lea.sflag [#allocation4], 1
    %13 = vsyncpa %s12, 0
    %14 = vsyncpa [#allocation7], 0
    %s15 = scalar_lea.sflag [#allocation7], 1
    %16 = vsyncpa %s15, 0
    %17 = vsyncpa [#allocation10], 0
    %s18 = scalar_lea.sflag [#allocation10], 1
    %19 = vsyncpa %s18, 0
    %20 = vsyncpa [#allocation5], 0
    %s21 = scalar_lea.sflag [#allocation5], 1
    %22 = vsyncpa %s21, 0
    loop: start=0, step=1, limit=6
    $region2: #{tpu_custom_call.1} parent=1 // loop_pre_header
      _
    $region3: #{tpu_custom_call.1} parent=1 // loop_header
      %s24 = sphi 0, %s28
      %p25 = scmp.ge.s32.totalorder %s24, 6
      %s31 = sphi 0, %s43
      %s32 = sphi 0, %s39
      %s33 = sphi 0, %s31
      %s34 = sphi 0, %s32
      %s35 = sphi 0, %s33
      %s36 = sphi 0, %s34
      %s46 = sphi 0, %s48
      %s49 = sphi 0, %s46
      %s50 = sphi 0, %s49
      %s66 = sphi 0, %s50
      %s72 = sphi 0, %s74
      %s75 = sphi 0, %s72
      %s76 = sphi 0, %s75
      %s92 = sphi 0, %s76
      %s98 = sphi 0, %s100
      %s101 = sphi 0, %s98
      %s102 = sphi 0, %s101
      %s118 = sphi 0, %s102
      %s124 = sphi 0, %s126
      %s127 = sphi 0, %s124
      %s128 = sphi 0, %s127
      %s144 = sphi 0, %s128
      %s148 = sphi 0, %s148
      %s150 = sphi 0, %s148
      %s151 = sphi 0, %s150
      %s165 = sphi 0, %s151
      %s169 = sphi 0, %s169
      %s171 = sphi 0, %s169
      %s172 = sphi 0, %s171
      %s186 = sphi 0, %s172
      %s192 = sphi 0, %s194
      %s195 = sphi 0, %s192
      %s196 = sphi 0, %s195
      %s212 = sphi 0, %s196
    $region4: #{tpu_custom_call.1} parent=1 // loop_header_branch
      %27 = sbr.rel (%p25) target = $region8
    $region5: #{tpu_custom_call.1} parent=1 // loop_body
      %s29 = ssub.s32 %s24, 1
      %s30 = ssub.s32 %s24, 2
      %s37 = sadd.s32 1, %s32
      %p38 = scmp.ge.s32.totalorder %s37, 2
      %s39 = scalar_select %p38, 0, %s37
      %s40 = sadd.s32 1, %s31
      %s41 = scalar_select %p38, %s40, %s31
      %p42 = scmp.ge.s32.totalorder %s41, 2
      %s43 = scalar_select %p42, 0, %s41
      %s44 = ssub.s32 %s32, %s39
      %p45 = scmp.eq.s32.totalorder %s44, 0
      %s47 = sadd.s32 %s46, 1
      %s48 = scalar_select %p45, %s46, %s47
      %p51 = pneg %p45
      %p52 = scmp.eq.s32.totalorder %s24, 3
      %p53 = por %p51, %p52
      %p54 = scmp.ne.s32.totalorder %s46, %s49
      %p55 = scmp.eq.s32.totalorder %s24, 0
      %p56 = por %p54, %p55
      %p57 = scmp.ne.s32.totalorder %s46, %s49
      %p58 = scmp.eq.s32.totalorder %s29, 3
      %p59 = por %p57, %p58
      %p60 = scmp.ne.s32.totalorder %s49, %s50
      %p61 = scmp.eq.s32.totalorder %s29, 0
      %p62 = por %p60, %p61
      %p63 = scmp.ne.s32.totalorder %s49, %s50
      %p64 = scmp.eq.s32.totalorder %s30, 3
      %p65 = por %p63, %p64
      %p67 = scmp.ne.s32.totalorder %s50, %s66
      %p68 = scmp.eq.s32.totalorder %s30, 0
      %p69 = por %p67, %p68
      %s70 = ssub.s32 %s31, %s43
      %p71 = scmp.eq.s32.totalorder %s70, 0
      %s73 = sadd.s32 %s72, 1
      %s74 = scalar_select %p71, %s72, %s73
      %p77 = pneg %p71
      %p78 = scmp.eq.s32.totalorder %s24, 3
      %p79 = por %p77, %p78
      %p80 = scmp.ne.s32.totalorder %s72, %s75
      %p81 = scmp.eq.s32.totalorder %s24, 0
      %p82 = por %p80, %p81
      %p83 = scmp.ne.s32.totalorder %s72, %s75
      %p84 = scmp.eq.s32.totalorder %s29, 3
      %p85 = por %p83, %p84
      %p86 = scmp.ne.s32.totalorder %s75, %s76
      %p87 = scmp.eq.s32.totalorder %s29, 0
      %p88 = por %p86, %p87
      %p89 = scmp.ne.s32.totalorder %s75, %s76
      %p90 = scmp.eq.s32.totalorder %s30, 3
      %p91 = por %p89, %p90
      %p93 = scmp.ne.s32.totalorder %s76, %s92
      %p94 = scmp.eq.s32.totalorder %s30, 0
      %p95 = por %p93, %p94
      %s96 = ssub.s32 %s32, %s39
      %p97 = scmp.eq.s32.totalorder %s96, 0
      %s99 = sadd.s32 %s98, 1
      %s100 = scalar_select %p97, %s98, %s99
      %p103 = pneg %p97
      %p104 = scmp.eq.s32.totalorder %s24, 3
      %p105 = por %p103, %p104
      %p106 = scmp.ne.s32.totalorder %s98, %s101
      %p107 = scmp.eq.s32.totalorder %s24, 0
      %p108 = por %p106, %p107
      %p109 = scmp.ne.s32.totalorder %s98, %s101
      %p110 = scmp.eq.s32.totalorder %s29, 3
      %p111 = por %p109, %p110
      %p112 = scmp.ne.s32.totalorder %s101, %s102
      %p113 = scmp.eq.s32.totalorder %s29, 0
      %p114 = por %p112, %p113
      %p115 = scmp.ne.s32.totalorder %s101, %s102
      %p116 = scmp.eq.s32.totalorder %s30, 3
      %p117 = por %p115, %p116
      %p119 = scmp.ne.s32.totalorder %s102, %s118
      %p120 = scmp.eq.s32.totalorder %s30, 0
      %p121 = por %p119, %p120
      %s122 = ssub.s32 %s32, %s39
      %p123 = scmp.eq.s32.totalorder %s122, 0
      %s125 = sadd.s32 %s124, 1
      %s126 = scalar_select %p123, %s124, %s125
      %p129 = pneg %p123
      %p130 = scmp.eq.s32.totalorder %s24, 3
      %p131 = por %p129, %p130
      %p132 = scmp.ne.s32.totalorder %s124, %s127
      %p133 = scmp.eq.s32.totalorder %s24, 0
      %p134 = por %p132, %p133
      %p135 = scmp.ne.s32.totalorder %s124, %s127
      %p136 = scmp.eq.s32.totalorder %s29, 3
      %p137 = por %p135, %p136
      %p138 = scmp.ne.s32.totalorder %s127, %s128
      %p139 = scmp.eq.s32.totalorder %s29, 0
      %p140 = por %p138, %p139
      %p141 = scmp.ne.s32.totalorder %s127, %s128
      %p142 = scmp.eq.s32.totalorder %s30, 3
      %p143 = por %p141, %p142
      %p145 = scmp.ne.s32.totalorder %s128, %s144
      %p146 = scmp.eq.s32.totalorder %s30, 0
      %p147 = por %p145, %p146
      %s149 = sadd.s32 %s148, 1
      %p152 = scmp.eq.s32.totalorder %s24, 3
      %p153 = scmp.ne.s32.totalorder %s148, %s150
      %p154 = scmp.eq.s32.totalorder %s24, 0
      %p155 = por %p153, %p154
      %p156 = scmp.ne.s32.totalorder %s148, %s150
      %p157 = scmp.eq.s32.totalorder %s29, 3
      %p158 = por %p156, %p157
      %p159 = scmp.ne.s32.totalorder %s150, %s151
      %p160 = scmp.eq.s32.totalorder %s29, 0
      %p161 = por %p159, %p160
      %p162 = scmp.ne.s32.totalorder %s150, %s151
      %p163 = scmp.eq.s32.totalorder %s30, 3
      %p164 = por %p162, %p163
      %p166 = scmp.ne.s32.totalorder %s151, %s165
      %p167 = scmp.eq.s32.totalorder %s30, 0
      %p168 = por %p166, %p167
      %s170 = sadd.s32 %s169, 1
      %p173 = scmp.eq.s32.totalorder %s24, 3
      %p174 = scmp.ne.s32.totalorder %s169, %s171
      %p175 = scmp.eq.s32.totalorder %s24, 0
      %p176 = por %p174, %p175
      %p177 = scmp.ne.s32.totalorder %s169, %s171
      %p178 = scmp.eq.s32.totalorder %s29, 3
      %p179 = por %p177, %p178
      %p180 = scmp.ne.s32.totalorder %s171, %s172
      %p181 = scmp.eq.s32.totalorder %s29, 0
      %p182 = por %p180, %p181
      %p183 = scmp.ne.s32.totalorder %s171, %s172
      %p184 = scmp.eq.s32.totalorder %s30, 3
      %p185 = por %p183, %p184
      %p187 = scmp.ne.s32.totalorder %s172, %s186
      %p188 = scmp.eq.s32.totalorder %s30, 0
      %p189 = por %p187, %p188
      %s190 = ssub.s32 %s31, %s43
      %p191 = scmp.eq.s32.totalorder %s190, 0
      %s193 = sadd.s32 %s192, 1
      %s194 = scalar_select %p191, %s192, %s193
      %p197 = pneg %p191
      %p198 = scmp.eq.s32.totalorder %s24, 3
      %p199 = por %p197, %p198
      %p200 = scmp.ne.s32.totalorder %s192, %s195
      %p201 = scmp.eq.s32.totalorder %s24, 0
      %p202 = por %p200, %p201
      %p203 = scmp.ne.s32.totalorder %s192, %s195
      %p204 = scmp.eq.s32.totalorder %s29, 3
      %p205 = por %p203, %p204
      %p206 = scmp.ne.s32.totalorder %s195, %s196
      %p207 = scmp.eq.s32.totalorder %s29, 0
      %p208 = por %p206, %p207
      %p209 = scmp.ne.s32.totalorder %s195, %s196
      %p210 = scmp.eq.s32.totalorder %s30, 3
      %p211 = por %p209, %p210
      %p213 = scmp.ne.s32.totalorder %s196, %s212
      %p214 = scmp.eq.s32.totalorder %s30, 0
      %p215 = por %p213, %p214
      %p216 = scmp.le.s32.totalorder 1, %s24
      %p217 = scmp.lt.s32.totalorder %s24, 5
      %p218 = pnand %p216, %p217
      %p219 = pneg %p218
      // Predicated region
      $region9: #{tpu_custom_call.1} parent=5 // pred_check
        _
      $region10: #{tpu_custom_call.1} parent=5 // pred_check_branch
        %221 = sbr.rel (%p218) target = $region12
      $region11: #{tpu_custom_call.1} parent=5 // pred_region
        %s222 = ssub.s32 %s24, 1
        // Predicated region
        $region13: #{tpu_custom_call.1} parent=11 // pred_check
          %p223 = pneg %p161
        $region14: #{tpu_custom_call.1} parent=11 // pred_check_branch
          %225 = sbr.rel (%p223) target = $region16
        $region15: #{tpu_custom_call.1} parent=11 // pred_region
          %s227 = ssub.s32 2048, 2048
          %228 = vsyncadd [#allocation10], %s227
          %s229 = sshll.u32 [#allocation11], 4
          %s230 = int_to_ptr.vmem [resolvable:$true] %s229
          %235 = dma.hbm_to_vmem [thread:$0]  %s4, 2048, %s230, [#allocation10], 64, 64, 4
        $region16: #{tpu_custom_call.1} parent=11 // pred_fallthru
          _
        // Predicated region
        $region17: #{tpu_custom_call.1} parent=11 // pred_check
          %p236 = pneg %p182
        $region18: #{tpu_custom_call.1} parent=11 // pred_check_branch
          %238 = sbr.rel (%p236) target = $region20
        $region19: #{tpu_custom_call.1} parent=11 // pred_region
          _
        $region20: #{tpu_custom_call.1} parent=11 // pred_fallthru
          _
      $region12: #{tpu_custom_call.1} parent=5 // pred_fallthru
        _
      %p239 = scmp.lt.s32.totalorder %s24, 4
      // Predicated region
      $region21: #{tpu_custom_call.1} parent=5 // pred_check
        %p240 = pneg %p239
      $region22: #{tpu_custom_call.1} parent=5 // pred_check_branch
        %242 = sbr.rel (%p240) target = $region24
      $region23: #{tpu_custom_call.1} parent=5 // pred_region
        // Predicated region
        $region25: #{tpu_custom_call.1} parent=23 // pred_check
          %p243 = pneg %p56
        $region26: #{tpu_custom_call.1} parent=23 // pred_check_branch
          %245 = sbr.rel (%p243) target = $region28
        $region27: #{tpu_custom_call.1} parent=23 // pred_region
          %s246 = sand.u32 %s46, 1
          %s247 = scalar_lea.sflag [#allocation4], %s246
          %s248 = sand.u32 %s46, 1
          %s249 = smul.addr %s248, 2
          %s250 = scalar_lea.vmem [#allocation3], %s249
          %s251 = smul.u32 2, %s32
          %s253 = ssub.s32 32, 32
          %254 = vsyncadd %s247, %s253
          %s255 = smul.addr %s251, 16
          %s256 = scalar_lea.hbm %s0, %s255
          %s258 = sshll.u32 %s250, 4
          %s259 = int_to_ptr.vmem [resolvable:$true] %s258
          %261 = dma.hbm_to_vmem [thread:$0]  %s256, 32, %s259, %s247
        $region28: #{tpu_custom_call.1} parent=23 // pred_fallthru
          _
        // Predicated region
        $region29: #{tpu_custom_call.1} parent=23 // pred_check
          %p262 = pneg %p82
        $region30: #{tpu_custom_call.1} parent=23 // pred_check_branch
          %264 = sbr.rel (%p262) target = $region32
        $region31: #{tpu_custom_call.1} parent=23 // pred_region
          %s265 = sand.u32 %s24, 1
          %s266 = scalar_lea.sflag [#allocation7], %s265
          %s267 = sand.u32 %s72, 1
          %s268 = smul.addr %s267, 128
          %s269 = scalar_lea.vmem [#allocation6], %s268
          %s270 = smul.u32 16, %s31
          %s272 = ssub.s32 2048, 2048
          %273 = vsyncadd %s266, %s272
          %s274 = smul.addr %s270, 128
          %s275 = scalar_lea.hbm %s1, %s274
          %s276 = sshll.u32 %s269, 4
          %s277 = int_to_ptr.vmem [resolvable:$true] %s276
          %282 = dma.hbm_to_vmem [thread:$0]  %s275, 2048, %s277, %s266, 128, 128, 8
        $region32: #{tpu_custom_call.1} parent=23 // pred_fallthru
          _
        // Predicated region
        $region33: #{tpu_custom_call.1} parent=23 // pred_check
          %p283 = pneg %p108
        $region34: #{tpu_custom_call.1} parent=23 // pred_check_branch
          %285 = sbr.rel (%p283) target = $region36
        $region35: #{tpu_custom_call.1} parent=23 // pred_region
          %s286 = sand.u32 %s24, 1
          %s287 = scalar_lea.sflag [#allocation7], %s286
          %s288 = sand.u32 %s98, 1
          %s289 = smul.addr %s288, 256
          %s290 = scalar_lea.vmem [#allocation8], %s289
          %s291 = smul.u32 32, %s32
          %s293 = ssub.s32 4096, 4096
          %294 = vsyncadd %s287, %s293
          %s295 = smul.addr %s291, 128
          %s296 = scalar_lea.hbm %s2, %s295
          %s297 = sshll.u32 %s290, 4
          %s298 = int_to_ptr.vmem [resolvable:$true] %s297
          %303 = dma.hbm_to_vmem [thread:$0]  %s296, 4096, %s298, %s287, 128, 128, 8
        $region36: #{tpu_custom_call.1} parent=23 // pred_fallthru
          _
        // Predicated region
        $region37: #{tpu_custom_call.1} parent=23 // pred_check
          %p304 = pneg %p134
        $region38: #{tpu_custom_call.1} parent=23 // pred_check_branch
          %306 = sbr.rel (%p304) target = $region40
        $region39: #{tpu_custom_call.1} parent=23 // pred_region
          %s307 = sand.u32 %s24, 1
          %s308 = scalar_lea.sflag [#allocation10], %s307
          %s309 = sand.u32 %s124, 1
          %s310 = smul.addr %s309, 256
          %s311 = scalar_lea.vmem [#allocation9], %s310
          %s312 = smul.u32 32, %s32
          %s314 = ssub.s32 4096, 4096
          %315 = vsyncadd %s308, %s314
          %s316 = smul.addr %s312, 128
          %s317 = scalar_lea.hbm %s3, %s316
          %s318 = sshll.u32 %s311, 4
          %s319 = int_to_ptr.vmem [resolvable:$true] %s318
          %324 = dma.hbm_to_vmem [thread:$0]  %s317, 4096, %s319, %s308, 128, 128, 8
        $region40: #{tpu_custom_call.1} parent=23 // pred_fallthru
          _
      $region24: #{tpu_custom_call.1} parent=5 // pred_fallthru
        _
      %p325 = scmp.le.s32.totalorder 1, %s24
      %p326 = scmp.lt.s32.totalorder %s24, 5
      %p327 = pnand %p325, %p326
      %p328 = pneg %p327
      // Predicated region
      $region41: #{tpu_custom_call.1} parent=5 // pred_check
        _
      $region42: #{tpu_custom_call.1} parent=5 // pred_check_branch
        %330 = sbr.rel (%p327) target = $region44
      $region43: #{tpu_custom_call.1} parent=5 // pred_region
        %s331 = ssub.s32 %s24, 1
        %s332 = sand.u32 %s49, 1
        %s333 = scalar_lea.sflag [#allocation4], %s332
        %s334 = sand.u32 %s49, 1
        %s335 = smul.addr %s334, 2
        %s336 = scalar_lea.vmem [#allocation3], %s335
        // Predicated region
        $region45: #{tpu_custom_call.1} parent=43 // pred_check
          %p337 = pneg %p62
        $region46: #{tpu_custom_call.1} parent=43 // pred_check_branch
          %339 = sbr.rel (%p337) target = $region48
        $region47: #{tpu_custom_call.1} parent=43 // pred_region
          %340 = dma.done %s333, 32
        $region48: #{tpu_custom_call.1} parent=43 // pred_fallthru
          _
        %s341 = sand.u32 %s29, 1
        %s342 = scalar_lea.sflag [#allocation7], %s341
        %s343 = sand.u32 %s75, 1
        %s344 = smul.addr %s343, 128
        %s345 = scalar_lea.vmem [#allocation6], %s344
        // Predicated region
        $region49: #{tpu_custom_call.1} parent=43 // pred_check
          %p346 = pneg %p88
        $region50: #{tpu_custom_call.1} parent=43 // pred_check_branch
          %348 = sbr.rel (%p346) target = $region52
        $region51: #{tpu_custom_call.1} parent=43 // pred_region
          %349 = dma.done %s342, 2048
        $region52: #{tpu_custom_call.1} parent=43 // pred_fallthru
          _
        %s350 = sand.u32 %s29, 1
        %s351 = scalar_lea.sflag [#allocation7], %s350
        %s352 = sand.u32 %s101, 1
        %s353 = smul.addr %s352, 256
        %s354 = scalar_lea.vmem [#allocation8], %s353
        // Predicated region
        $region53: #{tpu_custom_call.1} parent=43 // pred_check
          %p355 = pneg %p114
        $region54: #{tpu_custom_call.1} parent=43 // pred_check_branch
          %357 = sbr.rel (%p355) target = $region56
        $region55: #{tpu_custom_call.1} parent=43 // pred_region
          %358 = dma.done %s351, 4096
        $region56: #{tpu_custom_call.1} parent=43 // pred_fallthru
          _
        %s359 = sand.u32 %s29, 1
        %s360 = scalar_lea.sflag [#allocation10], %s359
        %s361 = sand.u32 %s127, 1
        %s362 = smul.addr %s361, 256
        %s363 = scalar_lea.vmem [#allocation9], %s362
        // Predicated region
        $region57: #{tpu_custom_call.1} parent=43 // pred_check
          %p364 = pneg %p140
        $region58: #{tpu_custom_call.1} parent=43 // pred_check_branch
          %366 = sbr.rel (%p364) target = $region60
        $region59: #{tpu_custom_call.1} parent=43 // pred_region
          %367 = dma.done %s360, 4096
        $region60: #{tpu_custom_call.1} parent=43 // pred_fallthru
          _
        // Predicated region
        $region61: #{tpu_custom_call.1} parent=43 // pred_check
          %p368 = pneg %p161
        $region62: #{tpu_custom_call.1} parent=43 // pred_check_branch
          %370 = sbr.rel (%p368) target = $region64
        $region63: #{tpu_custom_call.1} parent=43 // pred_region
          %371 = dma.done [#allocation10], 2048
        $region64: #{tpu_custom_call.1} parent=43 // pred_fallthru
          _
        %s372 = sand.u32 %s49, 1
        %s373 = scalar_lea.sflag [#allocation4], %s372
        %s374 = sand.u32 %s49, 1
        %s375 = smul.addr %s374, 2
        %s376 = scalar_lea.vmem [#allocation3], %s375
        %p377 = pneg %p62
        %p378 = pneg %p59
        %s379 = sand.u32 %s29, 1
        %s380 = scalar_lea.sflag [#allocation7], %s379
        %s381 = sand.u32 %s75, 1
        %s382 = smul.addr %s381, 128
        %s383 = scalar_lea.vmem [#allocation6], %s382
        %p384 = pneg %p88
        %p385 = pneg %p85
        %s386 = sand.u32 %s29, 1
        %s387 = scalar_lea.sflag [#allocation7], %s386
        %s388 = sand.u32 %s101, 1
        %s389 = smul.addr %s388, 256
        %s390 = scalar_lea.vmem [#allocation8], %s389
        %p391 = pneg %p114
        %p392 = pneg %p111
        %s393 = sand.u32 %s29, 1
        %s394 = scalar_lea.sflag [#allocation10], %s393
        %s395 = sand.u32 %s127, 1
        %s396 = smul.addr %s395, 256
        %s397 = scalar_lea.vmem [#allocation9], %s396
        %p398 = pneg %p140
        %p399 = pneg %p137
        %p400 = pneg %p161
        %p401 = pneg %p158
        %p402 = pneg %p182
        %p403 = pneg %p179
        %p404 = pneg %p208
        %p405 = pneg %p205
        %s406 = sand.u32 %s195, 1
        %s407 = scalar_lea.sflag [#allocation5], %s406
        %s408 = sand.u32 %s195, 1
        %s409 = smul.addr %s408, 128
        %s410 = scalar_lea.vmem [#allocation12], %s409
        %s411 = smul.u32 2, %s34
        %s412 = smul.u32 16, %s33
        %s413 = smul.u32 32, %s34
        %s414 = smul.u32 32, %s34
        %s415 = smul.u32 16, %s33
        %p417 = scmp.eq.s32.totalorder %s34, 0
        // Predicated region
        $region65: #{tpu_custom_call.1} parent=43 // pred_check
          %p418 = pneg %p417
        $region66: #{tpu_custom_call.1} parent=43 // pred_check_branch
          %420 = sbr.rel (%p418) target = $region68
        $region67: #{tpu_custom_call.1} parent=43 // pred_region
          %421 = vst [vmem:[#allocation2] sm:$0xff] 0.0
          %422 = vst [vmem:[#allocation2 + $0x8] sm:$0xff] 0.0
          %423 = vst [vmem:[#allocation2 + $0x10] sm:$0xff] 0.0
          %424 = vst [vmem:[#allocation2 + $0x18] sm:$0xff] 0.0
          %425 = vst [vmem:[#allocation2 + $0x20] sm:$0xff] 0.0
          %426 = vst [vmem:[#allocation2 + $0x28] sm:$0xff] 0.0
          %427 = vst [vmem:[#allocation2 + $0x30] sm:$0xff] 0.0
          %428 = vst [vmem:[#allocation2 + $0x38] sm:$0xff] 0.0
          %429 = vst [vmem:[#allocation2 + $0x40] sm:$0xff] 0.0
          %430 = vst [vmem:[#allocation2 + $0x48] sm:$0xff] 0.0
          %431 = vst [vmem:[#allocation2 + $0x50] sm:$0xff] 0.0
          %432 = vst [vmem:[#allocation2 + $0x58] sm:$0xff] 0.0
          %433 = vst [vmem:[#allocation2 + $0x60] sm:$0xff] 0.0
          %434 = vst [vmem:[#allocation2 + $0x68] sm:$0xff] 0.0
          %435 = vst [vmem:[#allocation2 + $0x70] sm:$0xff] 0.0
          %436 = vst [vmem:[#allocation2 + $0x78] sm:$0xff] 0.0
        $region68: #{tpu_custom_call.1} parent=43 // pred_fallthru
          _
        %v437 = vld [vmem:[%s354] sm:$0xff]
        %v438 = vld [vmem:[%s354 + $0x8] sm:$0xff]
        %v439 = vld [vmem:[%s354 + $0x10] sm:$0xff]
        %v440 = vld [vmem:[%s354 + $0x18] sm:$0xff]
        %v441 = vld [vmem:[%s354 + $0x20] sm:$0xff]
        %v442 = vld [vmem:[%s354 + $0x28] sm:$0xff]
        %v443 = vld [vmem:[%s354 + $0x30] sm:$0xff]
        %v444 = vld [vmem:[%s354 + $0x38] sm:$0xff]
        %v445 = vld [vmem:[%s354 + $0x40] sm:$0xff]
        %v446 = vld [vmem:[%s354 + $0x48] sm:$0xff]
        %v447 = vld [vmem:[%s354 + $0x50] sm:$0xff]
        %v448 = vld [vmem:[%s354 + $0x58] sm:$0xff]
        %v449 = vld [vmem:[%s354 + $0x60] sm:$0xff]
        %v450 = vld [vmem:[%s354 + $0x68] sm:$0xff]
        %v451 = vld [vmem:[%s354 + $0x70] sm:$0xff]
        %v452 = vld [vmem:[%s354 + $0x78] sm:$0xff]
        %v453 = vld [vmem:[%s354 + $0x80] sm:$0xff]
        %v454 = vld [vmem:[%s354 + $0x88] sm:$0xff]
        %v455 = vld [vmem:[%s354 + $0x90] sm:$0xff]
        %v456 = vld [vmem:[%s354 + $0x98] sm:$0xff]
        %v457 = vld [vmem:[%s354 + $0xa0] sm:$0xff]
        %v458 = vld [vmem:[%s354 + $0xa8] sm:$0xff]
        %v459 = vld [vmem:[%s354 + $0xb0] sm:$0xff]
        %v460 = vld [vmem:[%s354 + $0xb8] sm:$0xff]
        %v461 = vld [vmem:[%s354 + $0xc0] sm:$0xff]
        %v462 = vld [vmem:[%s354 + $0xc8] sm:$0xff]
        %v463 = vld [vmem:[%s354 + $0xd0] sm:$0xff]
        %v464 = vld [vmem:[%s354 + $0xd8] sm:$0xff]
        %v465 = vld [vmem:[%s354 + $0xe0] sm:$0xff]
        %v466 = vld [vmem:[%s354 + $0xe8] sm:$0xff]
        %v467 = vld [vmem:[%s354 + $0xf0] sm:$0xff]
        %v468 = vld [vmem:[%s354 + $0xf8] sm:$0xff]
        %v469 = vld [vmem:[%s363] sm:$0xff]
        %v470 = vld [vmem:[%s363 + $0x8] sm:$0xff]
        %v471 = vld [vmem:[%s363 + $0x10] sm:$0xff]
        %v472 = vld [vmem:[%s363 + $0x18] sm:$0xff]
        %v473 = vld [vmem:[%s363 + $0x20] sm:$0xff]
        %v474 = vld [vmem:[%s363 + $0x28] sm:$0xff]
        %v475 = vld [vmem:[%s363 + $0x30] sm:$0xff]
        %v476 = vld [vmem:[%s363 + $0x38] sm:$0xff]
        %v477 = vld [vmem:[%s363 + $0x40] sm:$0xff]
        %v478 = vld [vmem:[%s363 + $0x48] sm:$0xff]
        %v479 = vld [vmem:[%s363 + $0x50] sm:$0xff]
        %v480 = vld [vmem:[%s363 + $0x58] sm:$0xff]
        %v481 = vld [vmem:[%s363 + $0x60] sm:$0xff]
        %v482 = vld [vmem:[%s363 + $0x68] sm:$0xff]
        %v483 = vld [vmem:[%s363 + $0x70] sm:$0xff]
        %v484 = vld [vmem:[%s363 + $0x78] sm:$0xff]
        %v485 = vld [vmem:[%s363 + $0x80] sm:$0xff]
        %v486 = vld [vmem:[%s363 + $0x88] sm:$0xff]
        %v487 = vld [vmem:[%s363 + $0x90] sm:$0xff]
        %v488 = vld [vmem:[%s363 + $0x98] sm:$0xff]
        %v489 = vld [vmem:[%s363 + $0xa0] sm:$0xff]
        %v490 = vld [vmem:[%s363 + $0xa8] sm:$0xff]
        %v491 = vld [vmem:[%s363 + $0xb0] sm:$0xff]
        %v492 = vld [vmem:[%s363 + $0xb8] sm:$0xff]
        %v493 = vld [vmem:[%s363 + $0xc0] sm:$0xff]
        %v494 = vld [vmem:[%s363 + $0xc8] sm:$0xff]
        %v495 = vld [vmem:[%s363 + $0xd0] sm:$0xff]
        %v496 = vld [vmem:[%s363 + $0xd8] sm:$0xff]
        %v497 = vld [vmem:[%s363 + $0xe0] sm:$0xff]
        %v498 = vld [vmem:[%s363 + $0xe8] sm:$0xff]
        %v499 = vld [vmem:[%s363 + $0xf0] sm:$0xff]
        %v500 = vld [vmem:[%s363 + $0xf8] sm:$0xff]
        %v501 = vmul.f32 %v437, %v469
        %v502 = vmul.f32 %v438, %v470
        %v503 = vmul.f32 %v439, %v471
        %v504 = vmul.f32 %v440, %v472
        %v505 = vmul.f32 %v441, %v473
        %v506 = vmul.f32 %v442, %v474
        %v507 = vmul.f32 %v443, %v475
        %v508 = vmul.f32 %v444, %v476
        %v509 = vmul.f32 %v445, %v477
        %v510 = vmul.f32 %v446, %v478
        %v511 = vmul.f32 %v447, %v479
        %v512 = vmul.f32 %v448, %v480
        %v513 = vmul.f32 %v449, %v481
        %v514 = vmul.f32 %v450, %v482
        %v515 = vmul.f32 %v451, %v483
        %v516 = vmul.f32 %v452, %v484
        %v517 = vmul.f32 %v453, %v485
        %v518 = vmul.f32 %v454, %v486
        %v519 = vmul.f32 %v455, %v487
        %v520 = vmul.f32 %v456, %v488
        %v521 = vmul.f32 %v457, %v489
        %v522 = vmul.f32 %v458, %v490
        %v523 = vmul.f32 %v459, %v491
        %v524 = vmul.f32 %v460, %v492
        %v525 = vmul.f32 %v461, %v493
        %v526 = vmul.f32 %v462, %v494
        %v527 = vmul.f32 %v463, %v495
        %v528 = vmul.f32 %v464, %v496
        %v529 = vmul.f32 %v465, %v497
        %v530 = vmul.f32 %v466, %v498
        %v531 = vmul.f32 %v467, %v499
        %v532 = vmul.f32 %v468, %v500
        %v533 = vpack.c.bf16 %v502, %v501
        %v534 = vpack.c.bf16 %v504, %v503
        %v535 = vpack.c.bf16 %v506, %v505
        %v536 = vpack.c.bf16 %v508, %v507
        %v537 = vpack.c.bf16 %v510, %v509
        %v538 = vpack.c.bf16 %v512, %v511
        %v539 = vpack.c.bf16 %v514, %v513
        %v540 = vpack.c.bf16 %v516, %v515
        %v541 = vpack.c.bf16 %v518, %v517
        %v542 = vpack.c.bf16 %v520, %v519
        %v543 = vpack.c.bf16 %v522, %v521
        %v544 = vpack.c.bf16 %v524, %v523
        %v545 = vpack.c.bf16 %v526, %v525
        %v546 = vpack.c.bf16 %v528, %v527
        %v547 = vpack.c.bf16 %v530, %v529
        %v548 = vpack.c.bf16 %v532, %v531
        %s549 = smul.u32 %s33, 128
        %v550 = vlaneseq
        %v551 = vshrl.u32 %v550, 7
        %v552 = vadd.s32 %v551, 8
        %v553 = vadd.s32 %v551, 16
        %v554 = vadd.s32 %v551, 24
        %v555 = vadd.s32 %v551, 32
        %v556 = vadd.s32 %v551, 40
        %v557 = vadd.s32 %v551, 48
        %v558 = vadd.s32 %v551, 56
        %v559 = vadd.s32 %v551, 64
        %v560 = vadd.s32 %v551, 72
        %v561 = vadd.s32 %v551, 80
        %v562 = vadd.s32 %v551, 88
        %v563 = vadd.s32 %v551, 96
        %v564 = vadd.s32 %v551, 104
        %v565 = vadd.s32 %v551, 112
        %v566 = vadd.s32 %v551, 120
        %v567 = vstv %s549
        %v568 = vadd.s32 %v567, %v551
        %v569 = vadd.s32 %v567, %v552
        %v570 = vadd.s32 %v567, %v553
        %v571 = vadd.s32 %v567, %v554
        %v572 = vadd.s32 %v567, %v555
        %v573 = vadd.s32 %v567, %v556
        %v574 = vadd.s32 %v567, %v557
        %v575 = vadd.s32 %v567, %v558
        %v576 = vadd.s32 %v567, %v559
        %v577 = vadd.s32 %v567, %v560
        %v578 = vadd.s32 %v567, %v561
        %v579 = vadd.s32 %v567, %v562
        %v580 = vadd.s32 %v567, %v563
        %v581 = vadd.s32 %v567, %v564
        %v582 = vadd.s32 %v567, %v565
        %v583 = vadd.s32 %v567, %v566
        %v584 = vld [vmem:[%s336] sm:$0x3]
        %v585 = vlaneseq
        %v586 = vshrl.u32 %v585, 7
        %v587 = vsub.s32 0, %v586
        %v588 = vrot.slane %v584, %v587
        %v589 = vlaneseq
        %v590 = vshrl.u32 %v589, 7
        %v591 = vsub.s32 1, %v590
        %v592 = vrot.slane %v584, %v591
        %vm593 = vcmp.eq.s32.totalorder %v568, %v588
        %vm594 = vcmp.eq.s32.totalorder %v568, %v592
        %vm595 = vcmp.eq.s32.totalorder %v569, %v588
        %vm596 = vcmp.eq.s32.totalorder %v569, %v592
        %vm597 = vcmp.eq.s32.totalorder %v570, %v588
        %vm598 = vcmp.eq.s32.totalorder %v570, %v592
        %vm599 = vcmp.eq.s32.totalorder %v571, %v588
        %vm600 = vcmp.eq.s32.totalorder %v571, %v592
        %vm601 = vcmp.eq.s32.totalorder %v572, %v588
        %vm602 = vcmp.eq.s32.totalorder %v572, %v592
        %vm603 = vcmp.eq.s32.totalorder %v573, %v588
        %vm604 = vcmp.eq.s32.totalorder %v573, %v592
        %vm605 = vcmp.eq.s32.totalorder %v574, %v588
        %vm606 = vcmp.eq.s32.totalorder %v574, %v592
        %vm607 = vcmp.eq.s32.totalorder %v575, %v588
        %vm608 = vcmp.eq.s32.totalorder %v575, %v592
        %vm609 = vcmp.eq.s32.totalorder %v576, %v588
        %vm610 = vcmp.eq.s32.totalorder %v576, %v592
        %vm611 = vcmp.eq.s32.totalorder %v577, %v588
        %vm612 = vcmp.eq.s32.totalorder %v577, %v592
        %vm613 = vcmp.eq.s32.totalorder %v578, %v588
        %vm614 = vcmp.eq.s32.totalorder %v578, %v592
        %vm615 = vcmp.eq.s32.totalorder %v579, %v588
        %vm616 = vcmp.eq.s32.totalorder %v579, %v592
        %vm617 = vcmp.eq.s32.totalorder %v580, %v588
        %vm618 = vcmp.eq.s32.totalorder %v580, %v592
        %vm619 = vcmp.eq.s32.totalorder %v581, %v588
        %vm620 = vcmp.eq.s32.totalorder %v581, %v592
        %vm621 = vcmp.eq.s32.totalorder %v582, %v588
        %vm622 = vcmp.eq.s32.totalorder %v582, %v592
        %vm623 = vcmp.eq.s32.totalorder %v583, %v588
        %vm624 = vcmp.eq.s32.totalorder %v583, %v592
        %v625 = vsel %vm593, 1, 0
        %v626 = vsel %vm594, 1, 0
        %v627 = vsel %vm595, 1, 0
        %v628 = vsel %vm596, 1, 0
        %v629 = vsel %vm597, 1, 0
        %v630 = vsel %vm598, 1, 0
        %v631 = vsel %vm599, 1, 0
        %v632 = vsel %vm600, 1, 0
        %v633 = vsel %vm601, 1, 0
        %v634 = vsel %vm602, 1, 0
        %v635 = vsel %vm603, 1, 0
        %v636 = vsel %vm604, 1, 0
        %v637 = vsel %vm605, 1, 0
        %v638 = vsel %vm606, 1, 0
        %v639 = vsel %vm607, 1, 0
        %v640 = vsel %vm608, 1, 0
        %v641 = vsel %vm609, 1, 0
        %v642 = vsel %vm610, 1, 0
        %v643 = vsel %vm611, 1, 0
        %v644 = vsel %vm612, 1, 0
        %v645 = vsel %vm613, 1, 0
        %v646 = vsel %vm614, 1, 0
        %v647 = vsel %vm615, 1, 0
        %v648 = vsel %vm616, 1, 0
        %v649 = vsel %vm617, 1, 0
        %v650 = vsel %vm618, 1, 0
        %v651 = vsel %vm619, 1, 0
        %v652 = vsel %vm620, 1, 0
        %v653 = vsel %vm621, 1, 0
        %v654 = vsel %vm622, 1, 0
        %v655 = vsel %vm623, 1, 0
        %v656 = vsel %vm624, 1, 0
        %v657 = vcvt.s32.f32 %v625
        %v658 = vcvt.s32.f32 %v626
        %v659 = vcvt.s32.f32 %v627
        %v660 = vcvt.s32.f32 %v628
        %v661 = vcvt.s32.f32 %v629
        %v662 = vcvt.s32.f32 %v630
        %v663 = vcvt.s32.f32 %v631
        %v664 = vcvt.s32.f32 %v632
        %v665 = vcvt.s32.f32 %v633
        %v666 = vcvt.s32.f32 %v634
        %v667 = vcvt.s32.f32 %v635
        %v668 = vcvt.s32.f32 %v636
        %v669 = vcvt.s32.f32 %v637
        %v670 = vcvt.s32.f32 %v638
        %v671 = vcvt.s32.f32 %v639
        %v672 = vcvt.s32.f32 %v640
        %v673 = vcvt.s32.f32 %v641
        %v674 = vcvt.s32.f32 %v642
        %v675 = vcvt.s32.f32 %v643
        %v676 = vcvt.s32.f32 %v644
        %v677 = vcvt.s32.f32 %v645
        %v678 = vcvt.s32.f32 %v646
        %v679 = vcvt.s32.f32 %v647
        %v680 = vcvt.s32.f32 %v648
        %v681 = vcvt.s32.f32 %v649
        %v682 = vcvt.s32.f32 %v650
        %v683 = vcvt.s32.f32 %v651
        %v684 = vcvt.s32.f32 %v652
        %v685 = vcvt.s32.f32 %v653
        %v686 = vcvt.s32.f32 %v654
        %v687 = vcvt.s32.f32 %v655
        %v688 = vcvt.s32.f32 %v656
        %v689 = vpack.c.bf16 %v659, %v657
        %v690 = vpack.c.bf16 %v660, %v658
        %v691 = vpack.c.bf16 %v663, %v661
        %v692 = vpack.c.bf16 %v664, %v662
        %v693 = vpack.c.bf16 %v667, %v665
        %v694 = vpack.c.bf16 %v668, %v666
        %v695 = vpack.c.bf16 %v671, %v669
        %v696 = vpack.c.bf16 %v672, %v670
        %v697 = vpack.c.bf16 %v675, %v673
        %v698 = vpack.c.bf16 %v676, %v674
        %v699 = vpack.c.bf16 %v679, %v677
        %v700 = vpack.c.bf16 %v680, %v678
        %v701 = vpack.c.bf16 %v683, %v681
        %v702 = vpack.c.bf16 %v684, %v682
        %v703 = vpack.c.bf16 %v687, %v685
        %v704 = vpack.c.bf16 %v688, %v686
        %v705 = vld [vmem:[#allocation2] sm:$0xff]
        %v706 = vld [vmem:[#allocation2 + $0x8] sm:$0xff]
        %v707 = vld [vmem:[#allocation2 + $0x10] sm:$0xff]
        %v708 = vld [vmem:[#allocation2 + $0x18] sm:$0xff]
        %v709 = vld [vmem:[#allocation2 + $0x20] sm:$0xff]
        %v710 = vld [vmem:[#allocation2 + $0x28] sm:$0xff]
        %v711 = vld [vmem:[#allocation2 + $0x30] sm:$0xff]
        %v712 = vld [vmem:[#allocation2 + $0x38] sm:$0xff]
        %v713 = vld [vmem:[#allocation2 + $0x40] sm:$0xff]
        %v714 = vld [vmem:[#allocation2 + $0x48] sm:$0xff]
        %v715 = vld [vmem:[#allocation2 + $0x50] sm:$0xff]
        %v716 = vld [vmem:[#allocation2 + $0x58] sm:$0xff]
        %v717 = vld [vmem:[#allocation2 + $0x60] sm:$0xff]
        %v718 = vld [vmem:[#allocation2 + $0x68] sm:$0xff]
        %v719 = vld [vmem:[#allocation2 + $0x70] sm:$0xff]
        %v720 = vld [vmem:[#allocation2 + $0x78] sm:$0xff]
        %721 = vmatprep.subr.bf16.mxu0 0
        %722 = vmatpush1.bf16.msra.mxu0 %v533
        %723 = vmatprep.subr.bf16.mxu0 0
        %724 = vmatpush1.bf16.msra.mxu0 %v534
        %725 = vmatprep.subr.bf16.mxu0 0
        %726 = vmatpush1.bf16.msra.mxu0 %v535
        %727 = vmatprep.subr.bf16.mxu0 0
        %728 = vmatpush1.bf16.msra.mxu0 %v536
        %729 = vmatprep.subr.bf16.mxu0 0
        %730 = vmatpush1.bf16.msra.mxu0 %v537
        %731 = vmatprep.subr.bf16.mxu0 0
        %732 = vmatpush1.bf16.msra.mxu0 %v538
        %733 = vmatprep.subr.bf16.mxu0 0
        %734 = vmatpush1.bf16.msra.mxu0 %v539
        %735 = vmatprep.subr.bf16.mxu0 0
        %736 = vmatpush1.bf16.msra.mxu0 %v540
        %737 = vmatprep.subr.bf16.mxu0 0
        %738 = vmatpush1.bf16.msra.mxu0 %v541
        %739 = vmatprep.subr.bf16.mxu0 0
        %740 = vmatpush1.bf16.msra.mxu0 %v542
        %741 = vmatprep.subr.bf16.mxu0 0
        %742 = vmatpush1.bf16.msra.mxu0 %v543
        %743 = vmatprep.subr.bf16.mxu0 0
        %744 = vmatpush1.bf16.msra.mxu0 %v544
        %745 = vmatprep.subr.bf16.mxu0 0
        %746 = vmatpush1.bf16.msra.mxu0 %v545
        %747 = vmatprep.subr.bf16.mxu0 0
        %748 = vmatpush1.bf16.msra.mxu0 %v546
        %749 = vmatprep.subr.bf16.mxu0 0
        %750 = vmatpush1.bf16.msra.mxu0 %v547
        %751 = vmatprep.subr.bf16.mxu0 0
        %752 = vmatpush1.bf16.msra.mxu0 %v548
        %753 = vmatprep.mubr.bf16.mxu0 %v690
        %754 = vmatmul.mubr.bf16.gmra.mrb[0].mxu0 %v689
        %v755 = vpop.f32.mrb[0].mxu0
        %v756 = vadd.f32 0.0, %v755
        %v757 = vpop.f32.mrb[0].mxu0
        %v758 = vpop.f32.mrb[0].mxu0
        %v759 = vadd.f32 0.0, %v758
        %v760 = vpop.f32.mrb[0].mxu0
        %761 = vmatprep.mubr.bf16.mxu0 %v692
        %762 = vmatmul.mubr.bf16.gmra.mrb[0].mxu0 %v691
        %v763 = vpop.f32.mrb[0].mxu0
        %v764 = vadd.f32 0.0, %v763
        %v765 = vpop.f32.mrb[0].mxu0
        %v766 = vpop.f32.mrb[0].mxu0
        %v767 = vadd.f32 0.0, %v766
        %v768 = vpop.f32.mrb[0].mxu0
        %769 = vmatprep.mubr.bf16.mxu0 %v694
        %770 = vmatmul.mubr.bf16.gmra.mrb[0].mxu0 %v693
        %v771 = vpop.f32.mrb[0].mxu0
        %v772 = vadd.f32 0.0, %v771
        %v773 = vpop.f32.mrb[0].mxu0
        %v774 = vpop.f32.mrb[0].mxu0
        %v775 = vadd.f32 0.0, %v774
        %v776 = vpop.f32.mrb[0].mxu0
        %777 = vmatprep.mubr.bf16.mxu0 %v696
        %778 = vmatmul.mubr.bf16.gmra.mrb[0].mxu0 %v695
        %v779 = vpop.f32.mrb[0].mxu0
        %v780 = vadd.f32 0.0, %v779
        %v781 = vpop.f32.mrb[0].mxu0
        %v782 = vpop.f32.mrb[0].mxu0
        %v783 = vadd.f32 0.0, %v782
        %v784 = vpop.f32.mrb[0].mxu0
        %785 = vmatprep.mubr.bf16.mxu0 %v698
        %786 = vmatmul.mubr.bf16.gmra.mrb[0].mxu0 %v697
        %v787 = vpop.f32.mrb[0].mxu0
        %v788 = vadd.f32 0.0, %v787
        %v789 = vpop.f32.mrb[0].mxu0
        %v790 = vpop.f32.mrb[0].mxu0
        %v791 = vadd.f32 0.0, %v790
        %v792 = vpop.f32.mrb[0].mxu0
        %793 = vmatprep.mubr.bf16.mxu0 %v700
        %794 = vmatmul.mubr.bf16.gmra.mrb[0].mxu0 %v699
        %v795 = vpop.f32.mrb[0].mxu0
        %v796 = vadd.f32 0.0, %v795
        %v797 = vpop.f32.mrb[0].mxu0
        %v798 = vpop.f32.mrb[0].mxu0
        %v799 = vadd.f32 0.0, %v798
        %v800 = vpop.f32.mrb[0].mxu0
        %801 = vmatprep.mubr.bf16.mxu0 %v702
        %802 = vmatmul.mubr.bf16.gmra.mrb[0].mxu0 %v701
        %v803 = vpop.f32.mrb[0].mxu0
        %v804 = vadd.f32 0.0, %v803
        %v805 = vpop.f32.mrb[0].mxu0
        %v806 = vpop.f32.mrb[0].mxu0
        %v807 = vadd.f32 0.0, %v806
        %v808 = vpop.f32.mrb[0].mxu0
        %809 = vmatprep.mubr.bf16.mxu0 %v704
        %810 = vmatmul.mubr.bf16.gmra.mrb[0].mxu0 %v703
        %v811 = vpop.f32.mrb[0].mxu0
        %v812 = vadd.f32 0.0, %v811
        %v813 = vpop.f32.mrb[0].mxu0
        %v814 = vpop.f32.mrb[0].mxu0
        %v815 = vadd.f32 0.0, %v814
        %v816 = vpop.f32.mrb[0].mxu0
        %817 = vdwg.mxu0
        %v818 = vadd.f32 %v705, %v756
        %v819 = vadd.f32 %v706, %v759
        %v820 = vadd.f32 %v707, %v764
        %v821 = vadd.f32 %v708, %v767
        %v822 = vadd.f32 %v709, %v772
        %v823 = vadd.f32 %v710, %v775
        %v824 = vadd.f32 %v711, %v780
        %v825 = vadd.f32 %v712, %v783
        %v826 = vadd.f32 %v713, %v788
        %v827 = vadd.f32 %v714, %v791
        %v828 = vadd.f32 %v715, %v796
        %v829 = vadd.f32 %v716, %v799
        %v830 = vadd.f32 %v717, %v804
        %v831 = vadd.f32 %v718, %v807
        %v832 = vadd.f32 %v719, %v812
        %v833 = vadd.f32 %v720, %v815
        %834 = vst [vmem:[#allocation2] sm:$0xff] %v818
        %835 = vst [vmem:[#allocation2 + $0x8] sm:$0xff] %v819
        %836 = vst [vmem:[#allocation2 + $0x10] sm:$0xff] %v820
        %837 = vst [vmem:[#allocation2 + $0x18] sm:$0xff] %v821
        %838 = vst [vmem:[#allocation2 + $0x20] sm:$0xff] %v822
        %839 = vst [vmem:[#allocation2 + $0x28] sm:$0xff] %v823
        %840 = vst [vmem:[#allocation2 + $0x30] sm:$0xff] %v824
        %841 = vst [vmem:[#allocation2 + $0x38] sm:$0xff] %v825
        %842 = vst [vmem:[#allocation2 + $0x40] sm:$0xff] %v826
        %843 = vst [vmem:[#allocation2 + $0x48] sm:$0xff] %v827
        %844 = vst [vmem:[#allocation2 + $0x50] sm:$0xff] %v828
        %845 = vst [vmem:[#allocation2 + $0x58] sm:$0xff] %v829
        %846 = vst [vmem:[#allocation2 + $0x60] sm:$0xff] %v830
        %847 = vst [vmem:[#allocation2 + $0x68] sm:$0xff] %v831
        %848 = vst [vmem:[#allocation2 + $0x70] sm:$0xff] %v832
        %849 = vst [vmem:[#allocation2 + $0x78] sm:$0xff] %v833
        %p850 = scmp.eq.s32.totalorder %s34, 1
        // Predicated region
        $region69: #{tpu_custom_call.1} parent=43 // pred_check
          %p851 = pneg %p850
        $region70: #{tpu_custom_call.1} parent=43 // pred_check_branch
          %853 = sbr.rel (%p851) target = $region72
        $region71: #{tpu_custom_call.1} parent=43 // pred_region
          %v854 = vld [vmem:[#allocation2] sm:$0xff]
          %v855 = vld [vmem:[#allocation2 + $0x8] sm:$0xff]
          %v856 = vld [vmem:[#allocation2 + $0x10] sm:$0xff]
          %v857 = vld [vmem:[#allocation2 + $0x18] sm:$0xff]
          %v858 = vld [vmem:[#allocation2 + $0x20] sm:$0xff]
          %v859 = vld [vmem:[#allocation2 + $0x28] sm:$0xff]
          %v860 = vld [vmem:[#allocation2 + $0x30] sm:$0xff]
          %v861 = vld [vmem:[#allocation2 + $0x38] sm:$0xff]
          %v862 = vld [vmem:[#allocation2 + $0x40] sm:$0xff]
          %v863 = vld [vmem:[#allocation2 + $0x48] sm:$0xff]
          %v864 = vld [vmem:[#allocation2 + $0x50] sm:$0xff]
          %v865 = vld [vmem:[#allocation2 + $0x58] sm:$0xff]
          %v866 = vld [vmem:[#allocation2 + $0x60] sm:$0xff]
          %v867 = vld [vmem:[#allocation2 + $0x68] sm:$0xff]
          %v868 = vld [vmem:[#allocation2 + $0x70] sm:$0xff]
          %v869 = vld [vmem:[#allocation2 + $0x78] sm:$0xff]
          %v870 = vld [vmem:[%s345] sm:$0xff]
          %v871 = vld [vmem:[%s345 + $0x8] sm:$0xff]
          %v872 = vld [vmem:[%s345 + $0x10] sm:$0xff]
          %v873 = vld [vmem:[%s345 + $0x18] sm:$0xff]
          %v874 = vld [vmem:[%s345 + $0x20] sm:$0xff]
          %v875 = vld [vmem:[%s345 + $0x28] sm:$0xff]
          %v876 = vld [vmem:[%s345 + $0x30] sm:$0xff]
          %v877 = vld [vmem:[%s345 + $0x38] sm:$0xff]
          %v878 = vld [vmem:[%s345 + $0x40] sm:$0xff]
          %v879 = vld [vmem:[%s345 + $0x48] sm:$0xff]
          %v880 = vld [vmem:[%s345 + $0x50] sm:$0xff]
          %v881 = vld [vmem:[%s345 + $0x58] sm:$0xff]
          %v882 = vld [vmem:[%s345 + $0x60] sm:$0xff]
          %v883 = vld [vmem:[%s345 + $0x68] sm:$0xff]
          %v884 = vld [vmem:[%s345 + $0x70] sm:$0xff]
          %v885 = vld [vmem:[%s345 + $0x78] sm:$0xff]
          %v886 = vpack.c.bf16 %v855, %v854
          %v887 = vpack.c.bf16 %v871, %v870
          %v888 = vpack.c.bf16 %v857, %v856
          %v889 = vpack.c.bf16 %v873, %v872
          %v890 = vpack.c.bf16 %v859, %v858
          %v891 = vpack.c.bf16 %v875, %v874
          %v892 = vpack.c.bf16 %v861, %v860
          %v893 = vpack.c.bf16 %v877, %v876
          %v894 = vpack.c.bf16 %v863, %v862
          %v895 = vpack.c.bf16 %v879, %v878
          %v896 = vpack.c.bf16 %v865, %v864
          %v897 = vpack.c.bf16 %v881, %v880
          %v898 = vpack.c.bf16 %v867, %v866
          %v899 = vpack.c.bf16 %v883, %v882
          %v900 = vpack.c.bf16 %v869, %v868
          %v901 = vpack.c.bf16 %v885, %v884
          %v902 = vld [vmem:[#allocation11] sm:$0xf]
          %v903 = vld [vmem:[#allocation11 + $0x4] sm:$0xf]
          %v904 = vld [vmem:[#allocation11 + $0x8] sm:$0xf]
          %v905 = vld [vmem:[#allocation11 + $0xc] sm:$0xf]
          %v906 = vld [vmem:[#allocation11 + $0x10] sm:$0xf]
          %v907 = vld [vmem:[#allocation11 + $0x14] sm:$0xf]
          %v908 = vld [vmem:[#allocation11 + $0x18] sm:$0xf]
          %v909 = vld [vmem:[#allocation11 + $0x1c] sm:$0xf]
          %v910 = vld [vmem:[#allocation11 + $0x20] sm:$0xf]
          %v911 = vld [vmem:[#allocation11 + $0x24] sm:$0xf]
          %v912 = vld [vmem:[#allocation11 + $0x28] sm:$0xf]
          %v913 = vld [vmem:[#allocation11 + $0x2c] sm:$0xf]
          %v914 = vld [vmem:[#allocation11 + $0x30] sm:$0xf]
          %v915 = vld [vmem:[#allocation11 + $0x34] sm:$0xf]
          %v916 = vld [vmem:[#allocation11 + $0x38] sm:$0xf]
          %v917 = vld [vmem:[#allocation11 + $0x3c] sm:$0xf]
          %v918 = vld [vmem:[#allocation11 + $0x40] sm:$0xf]
          %v919 = vld [vmem:[#allocation11 + $0x44] sm:$0xf]
          %v920 = vld [vmem:[#allocation11 + $0x48] sm:$0xf]
          %v921 = vld [vmem:[#allocation11 + $0x4c] sm:$0xf]
          %v922 = vld [vmem:[#allocation11 + $0x50] sm:$0xf]
          %v923 = vld [vmem:[#allocation11 + $0x54] sm:$0xf]
          %v924 = vld [vmem:[#allocation11 + $0x58] sm:$0xf]
          %v925 = vld [vmem:[#allocation11 + $0x5c] sm:$0xf]
          %v926 = vld [vmem:[#allocation11 + $0x60] sm:$0xf]
          %v927 = vld [vmem:[#allocation11 + $0x64] sm:$0xf]
          %v928 = vld [vmem:[#allocation11 + $0x68] sm:$0xf]
          %v929 = vld [vmem:[#allocation11 + $0x6c] sm:$0xf]
          %v930 = vld [vmem:[#allocation11 + $0x70] sm:$0xf]
          %v931 = vld [vmem:[#allocation11 + $0x74] sm:$0xf]
          %v932 = vld [vmem:[#allocation11 + $0x78] sm:$0xf]
          %v933 = vld [vmem:[#allocation11 + $0x7c] sm:$0xf]
          %v934 = vld [vmem:[%s5] sm:$0x1]
          %v936 = vlaneseq
          %v937 = vshrl.u32 %v936, 7
          %v938 = vsub.s32 0, %v937
          %v939 = vrot.slane %v934, %v938
          %v973 = vunpack.c.l.b16 %v902
          %v974 = vunpack.c.l.b16 %v903
          %v975 = vunpack.c.l.b16 %v904
          %v976 = vunpack.c.l.b16 %v905
          %v977 = vunpack.c.l.b16 %v906
          %v978 = vunpack.c.l.b16 %v907
          %v979 = vunpack.c.l.b16 %v908
          %v980 = vunpack.c.l.b16 %v909
          %v981 = vunpack.c.l.b16 %v910
          %v982 = vunpack.c.l.b16 %v911
          %v983 = vunpack.c.l.b16 %v912
          %v984 = vunpack.c.l.b16 %v913
          %v985 = vunpack.c.l.b16 %v914
          %v986 = vunpack.c.l.b16 %v915
          %v987 = vunpack.c.l.b16 %v916
          %v988 = vunpack.c.l.b16 %v917
          %v989 = vunpack.c.l.b16 %v918
          %v990 = vunpack.c.l.b16 %v919
          %v991 = vunpack.c.l.b16 %v920
          %v992 = vunpack.c.l.b16 %v921
          %v993 = vunpack.c.l.b16 %v922
          %v994 = vunpack.c.l.b16 %v923
          %v995 = vunpack.c.l.b16 %v924
          %v996 = vunpack.c.l.b16 %v925
          %v997 = vunpack.c.l.b16 %v926
          %v998 = vunpack.c.l.b16 %v927
          %v999 = vunpack.c.l.b16 %v928
          %v1000 = vunpack.c.l.b16 %v929
          %v1001 = vunpack.c.l.b16 %v930
          %v1002 = vunpack.c.l.b16 %v931
          %v1003 = vunpack.c.l.b16 %v932
          %v1004 = vunpack.c.l.b16 %v933
          %v1005 = vpack.c.b16 %v974, %v973
          %v1006 = vpack.c.b16 %v976, %v975
          %v1007 = vpack.c.b16 %v978, %v977
          %v1008 = vpack.c.b16 %v980, %v979
          %v1009 = vpack.c.b16 %v982, %v981
          %v1010 = vpack.c.b16 %v984, %v983
          %v1011 = vpack.c.b16 %v986, %v985
          %v1012 = vpack.c.b16 %v988, %v987
          %v1013 = vpack.c.b16 %v990, %v989
          %v1014 = vpack.c.b16 %v992, %v991
          %v1015 = vpack.c.b16 %v994, %v993
          %v1016 = vpack.c.b16 %v996, %v995
          %v1017 = vpack.c.b16 %v998, %v997
          %v1018 = vpack.c.b16 %v1000, %v999
          %v1019 = vpack.c.b16 %v1002, %v1001
          %v1020 = vpack.c.b16 %v1004, %v1003
          %1037 = vmatprep.subr.bf16.mxu0 0
          %1038 = vmatpush1.bf16.msra.mxu0 %v1005
          %1039 = vmatprep.subr.bf16.mxu0 0
          %1040 = vmatpush1.bf16.msra.mxu0 %v1006
          %1041 = vmatprep.subr.bf16.mxu0 0
          %1042 = vmatpush1.bf16.msra.mxu0 %v1007
          %1043 = vmatprep.subr.bf16.mxu0 0
          %1044 = vmatpush1.bf16.msra.mxu0 %v1008
          %1045 = vmatprep.subr.bf16.mxu0 0
          %1046 = vmatpush1.bf16.msra.mxu0 %v1009
          %1047 = vmatprep.subr.bf16.mxu0 0
          %1048 = vmatpush1.bf16.msra.mxu0 %v1010
          %1049 = vmatprep.subr.bf16.mxu0 0
          %1050 = vmatpush1.bf16.msra.mxu0 %v1011
          %1051 = vmatprep.subr.bf16.mxu0 0
          %1052 = vmatpush1.bf16.msra.mxu0 %v1012
          %1053 = vmatprep.subr.bf16.mxu0 0
          %1054 = vmatpush1.bf16.msra.mxu0 %v1013
          %1055 = vmatprep.subr.bf16.mxu0 0
          %1056 = vmatpush1.bf16.msra.mxu0 %v1014
          %1057 = vmatprep.subr.bf16.mxu0 0
          %1058 = vmatpush1.bf16.msra.mxu0 %v1015
          %1059 = vmatprep.subr.bf16.mxu0 0
          %1060 = vmatpush1.bf16.msra.mxu0 %v1016
          %1061 = vmatprep.subr.bf16.mxu0 0
          %1062 = vmatpush1.bf16.msra.mxu0 %v1017
          %1063 = vmatprep.subr.bf16.mxu0 0
          %1064 = vmatpush1.bf16.msra.mxu0 %v1018
          %1065 = vmatprep.subr.bf16.mxu0 0
          %1066 = vmatpush1.bf16.msra.mxu0 %v1019
          %1067 = vmatprep.subr.bf16.mxu0 0
          %1068 = vmatpush1.bf16.msra.mxu0 %v1020
          %1069 = vmatprep.mubr.bf16.mxu0 %v887
          %1070 = vmatmul.mubr.bf16.gmra.mrb[0].mxu0 %v886
          %v1071 = vpop.f32.mrb[0].mxu0
          %v1072 = vadd.f32 %v939, %v1071
          %v1073 = vpop.f32.mrb[0].mxu0
          %v1074 = vpop.f32.mrb[0].mxu0
          %v1075 = vadd.f32 %v939, %v1074
          %v1076 = vpop.f32.mrb[0].mxu0
          %1077 = vmatprep.mubr.bf16.mxu0 %v889
          %1078 = vmatmul.mubr.bf16.gmra.mrb[0].mxu0 %v888
          %v1079 = vpop.f32.mrb[0].mxu0
          %v1080 = vadd.f32 %v939, %v1079
          %v1081 = vpop.f32.mrb[0].mxu0
          %v1082 = vpop.f32.mrb[0].mxu0
          %v1083 = vadd.f32 %v939, %v1082
          %v1084 = vpop.f32.mrb[0].mxu0
          %1085 = vmatprep.mubr.bf16.mxu0 %v891
          %1086 = vmatmul.mubr.bf16.gmra.mrb[0].mxu0 %v890
          %v1087 = vpop.f32.mrb[0].mxu0
          %v1088 = vadd.f32 %v939, %v1087
          %v1089 = vpop.f32.mrb[0].mxu0
          %v1090 = vpop.f32.mrb[0].mxu0
          %v1091 = vadd.f32 %v939, %v1090
          %v1092 = vpop.f32.mrb[0].mxu0
          %1093 = vmatprep.mubr.bf16.mxu0 %v893
          %1094 = vmatmul.mubr.bf16.gmra.mrb[0].mxu0 %v892
          %v1095 = vpop.f32.mrb[0].mxu0
          %v1096 = vadd.f32 %v939, %v1095
          %v1097 = vpop.f32.mrb[0].mxu0
          %v1098 = vpop.f32.mrb[0].mxu0
          %v1099 = vadd.f32 %v939, %v1098
          %v1100 = vpop.f32.mrb[0].mxu0
          %1101 = vmatprep.mubr.bf16.mxu0 %v895
          %1102 = vmatmul.mubr.bf16.gmra.mrb[0].mxu0 %v894
          %v1103 = vpop.f32.mrb[0].mxu0
          %v1104 = vadd.f32 %v939, %v1103
          %v1105 = vpop.f32.mrb[0].mxu0
          %v1106 = vpop.f32.mrb[0].mxu0
          %v1107 = vadd.f32 %v939, %v1106
          %v1108 = vpop.f32.mrb[0].mxu0
          %1109 = vmatprep.mubr.bf16.mxu0 %v897
          %1110 = vmatmul.mubr.bf16.gmra.mrb[0].mxu0 %v896
          %v1111 = vpop.f32.mrb[0].mxu0
          %v1112 = vadd.f32 %v939, %v1111
          %v1113 = vpop.f32.mrb[0].mxu0
          %v1114 = vpop.f32.mrb[0].mxu0
          %v1115 = vadd.f32 %v939, %v1114
          %v1116 = vpop.f32.mrb[0].mxu0
          %1117 = vmatprep.mubr.bf16.mxu0 %v899
          %1118 = vmatmul.mubr.bf16.gmra.mrb[0].mxu0 %v898
          %v1119 = vpop.f32.mrb[0].mxu0
          %v1120 = vadd.f32 %v939, %v1119
          %v1121 = vpop.f32.mrb[0].mxu0
          %v1122 = vpop.f32.mrb[0].mxu0
          %v1123 = vadd.f32 %v939, %v1122
          %v1124 = vpop.f32.mrb[0].mxu0
          %1125 = vmatprep.mubr.bf16.mxu0 %v901
          %1126 = vmatmul.mubr.bf16.gmra.mrb[0].mxu0 %v900
          %v1127 = vpop.f32.mrb[0].mxu0
          %v1128 = vadd.f32 %v939, %v1127
          %v1129 = vpop.f32.mrb[0].mxu0
          %v1130 = vpop.f32.mrb[0].mxu0
          %v1131 = vadd.f32 %v939, %v1130
          %v1132 = vpop.f32.mrb[0].mxu0
          %1133 = vdwg.mxu0
          %v1134 = vmax.f32 %v1072, 0.0
          %v1135 = vmax.f32 %v1075, 0.0
          %v1136 = vmax.f32 %v1080, 0.0
          %v1137 = vmax.f32 %v1083, 0.0
          %v1138 = vmax.f32 %v1088, 0.0
          %v1139 = vmax.f32 %v1091, 0.0
          %v1140 = vmax.f32 %v1096, 0.0
          %v1141 = vmax.f32 %v1099, 0.0
          %v1142 = vmax.f32 %v1104, 0.0
          %v1143 = vmax.f32 %v1107, 0.0
          %v1144 = vmax.f32 %v1112, 0.0
          %v1145 = vmax.f32 %v1115, 0.0
          %v1146 = vmax.f32 %v1120, 0.0
          %v1147 = vmax.f32 %v1123, 0.0
          %v1148 = vmax.f32 %v1128, 0.0
          %v1149 = vmax.f32 %v1131, 0.0
          %v1150 = vadd.f32 %v1134, %v870
          %v1151 = vadd.f32 %v1135, %v871
          %v1152 = vadd.f32 %v1136, %v872
          %v1153 = vadd.f32 %v1137, %v873
          %v1154 = vadd.f32 %v1138, %v874
          %v1155 = vadd.f32 %v1139, %v875
          %v1156 = vadd.f32 %v1140, %v876
          %v1157 = vadd.f32 %v1141, %v877
          %v1158 = vadd.f32 %v1142, %v878
          %v1159 = vadd.f32 %v1143, %v879
          %v1160 = vadd.f32 %v1144, %v880
          %v1161 = vadd.f32 %v1145, %v881
          %v1162 = vadd.f32 %v1146, %v882
          %v1163 = vadd.f32 %v1147, %v883
          %v1164 = vadd.f32 %v1148, %v884
          %v1165 = vadd.f32 %v1149, %v885
          %1166 = vst [vmem:[%s410] sm:$0xff] %v1150
          %1167 = vst [vmem:[%s410 + $0x8] sm:$0xff] %v1151
          %1168 = vst [vmem:[%s410 + $0x10] sm:$0xff] %v1152
          %1169 = vst [vmem:[%s410 + $0x18] sm:$0xff] %v1153
          %1170 = vst [vmem:[%s410 + $0x20] sm:$0xff] %v1154
          %1171 = vst [vmem:[%s410 + $0x28] sm:$0xff] %v1155
          %1172 = vst [vmem:[%s410 + $0x30] sm:$0xff] %v1156
          %1173 = vst [vmem:[%s410 + $0x38] sm:$0xff] %v1157
          %1174 = vst [vmem:[%s410 + $0x40] sm:$0xff] %v1158
          %1175 = vst [vmem:[%s410 + $0x48] sm:$0xff] %v1159
          %1176 = vst [vmem:[%s410 + $0x50] sm:$0xff] %v1160
          %1177 = vst [vmem:[%s410 + $0x58] sm:$0xff] %v1161
          %1178 = vst [vmem:[%s410 + $0x60] sm:$0xff] %v1162
          %1179 = vst [vmem:[%s410 + $0x68] sm:$0xff] %v1163
          %1180 = vst [vmem:[%s410 + $0x70] sm:$0xff] %v1164
          %1181 = vst [vmem:[%s410 + $0x78] sm:$0xff] %v1165
        $region72: #{tpu_custom_call.1} parent=43 // pred_fallthru
          _
        %s1182 = sand.u32 %s195, 1
        %s1183 = scalar_lea.sflag [#allocation5], %s1182
        %s1184 = sand.u32 %s195, 1
        %s1185 = smul.addr %s1184, 128
        %s1186 = scalar_lea.vmem [#allocation12], %s1185
        // Predicated region
        $region73: #{tpu_custom_call.1} parent=43 // pred_check
          %p1187 = pneg %p205
        $region74: #{tpu_custom_call.1} parent=43 // pred_check_branch
          %1189 = sbr.rel (%p1187) target = $region76
        $region75: #{tpu_custom_call.1} parent=43 // pred_region
          %s1190 = smul.u32 16, %s33
          %s1192 = ssub.s32 2048, 2048
          %1193 = vsyncadd %s1183, %s1192
          %s1194 = smul.addr %s1190, 128
          %s1195 = scalar_lea.hbm %s6, %s1194
          %s1196 = sshll.u32 %s1186, 4
          %s1197 = int_to_ptr.vmem [resolvable:$true] %s1196
          %1202 = dma.vmem_to_hbm [thread:$0]  %s1197, 2048, %s1195, %s1183, 128, 128, 8
        $region76: #{tpu_custom_call.1} parent=43 // pred_fallthru
          _
      $region44: #{tpu_custom_call.1} parent=5 // pred_fallthru
        _
      %p1203 = scmp.le.s32.totalorder 2, %s24
      // Predicated region
      $region77: #{tpu_custom_call.1} parent=5 // pred_check
        %p1204 = pneg %p1203
      $region78: #{tpu_custom_call.1} parent=5 // pred_check_branch
        %1206 = sbr.rel (%p1204) target = $region80
      $region79: #{tpu_custom_call.1} parent=5 // pred_region
        %s1207 = ssub.s32 %s24, 2
        // Predicated region
        $region81: #{tpu_custom_call.1} parent=79 // pred_check
          %p1208 = pneg %p211
        $region82: #{tpu_custom_call.1} parent=79 // pred_check_branch
          %1210 = sbr.rel (%p1208) target = $region84
        $region83: #{tpu_custom_call.1} parent=79 // pred_region
          %s1211 = sand.u32 %s196, 1
          %s1212 = scalar_lea.sflag [#allocation5], %s1211
          %s1213 = sand.u32 %s196, 1
          %s1214 = smul.addr %s1213, 128
          %s1215 = scalar_lea.vmem [#allocation12], %s1214
          %1216 = dma.done %s1212, 2048
        $region84: #{tpu_custom_call.1} parent=79 // pred_fallthru
          _
      $region80: #{tpu_custom_call.1} parent=5 // pred_fallthru
        _
    $region6: #{tpu_custom_call.1} parent=1 // loop_footer
      %s28 = sadd.s32 1, %s24
    $region7: #{tpu_custom_call.1} parent=1 // loop_footer_branch
      %23 = sbr.rel target = $region3
    $region8: #{tpu_custom_call.1} parent=1 // loop_exit
      _
    %1217 = vsyncpa [#allocation4], 1
    %s1218 = scalar_lea.sflag [#allocation4], 1
    %1219 = vsyncpa %s1218, 1
    %1220 = vsyncpa [#allocation7], 1
    %s1221 = scalar_lea.sflag [#allocation7], 1
    %1222 = vsyncpa %s1221, 1
    %1223 = vsyncpa [#allocation10], 1
    %s1224 = scalar_lea.sflag [#allocation10], 1
    %1225 = vsyncpa %s1224, 1
    %1226 = vsyncpa [#allocation5], 1
    %s1227 = scalar_lea.sflag [#allocation5], 1
    %1228 = vsyncpa %s1227, 1

</llo_original>
